<compile_context>
chip_gen: v7x
topology: tpu7x:2x2x1
jax: 0.10.0
libtpu: 0.0.40
codegen_flags: <defaults>
</compile_context>

<pallas_src>
import functools

import jax
import jax.numpy as jnp
from jax.experimental import pallas as pl
from jax.experimental.pallas import tpu as pltpu


_LANE = 128
_VMEM_LIMIT = 32 * 1024 * 1024  # generous but well under every chip's capacity


def _round_up(a: int, b: int) -> int:
    return (a + b - 1) // b * b


# ---------------------------------------------------------------------------
# Pallas kernel (the user lambda is traced into the kernel body)
# ---------------------------------------------------------------------------
def _lambda_block_kernel(lambd, x_ref, o_ref):
    o_ref[...] = lambd(x_ref[...]).astype(o_ref.dtype)


# ---------------------------------------------------------------------------
# Wrappers
# ---------------------------------------------------------------------------
def _apply_elementwise(lambd, x, *, max_block_rows=2048):
    """Tiled, lane-dense path for elementwise (shape/rank/position-preserving)
    lambdas.  Flatten -> (rows, 128) -> tile rows with a 'parallel' grid."""
    shape, n = x.shape, x.size
    rows = _round_up(max(n, 1), _LANE) // _LANE            # cdiv(n, 128)
    block_rows = min(max_block_rows, _round_up(rows, 8))   # (8,128)-aligned tile
    rows_p = _round_up(rows, block_rows)

    flat = jnp.ravel(x)
    pad = rows_p * _LANE - n
    if pad:
        flat = jnp.pad(flat, (0, pad))
    x2d = flat.reshape(rows_p, _LANE)

    out_dtype = jax.eval_shape(
        lambd, jax.ShapeDtypeStruct((block_rows, _LANE), x.dtype)
    ).dtype

    y2d = pl.pallas_call(
        functools.partial(_lambda_block_kernel, lambd),
        out_shape=jax.ShapeDtypeStruct((rows_p, _LANE), out_dtype),
        grid=(rows_p // block_rows,),
        in_specs=[pl.BlockSpec((block_rows, _LANE), lambda i: (i, 0))],
        out_specs=pl.BlockSpec((block_rows, _LANE), lambda i: (i, 0)),
        compiler_params=pltpu.CompilerParams(
            dimension_semantics=("parallel",),   # shards over v7x's 2 TCs
            vmem_limit_bytes=_VMEM_LIMIT,        # only ~4 MiB actually used
        ),
    )(x2d)
    return y2d.reshape(-1)[:n].reshape(shape)


def _apply_whole_array(lambd, x):
    """Always-correct path: run the lambda on the whole array in VMEM (single
    block).  Output shape/dtype comes from jax.eval_shape, so shape-changing
    lambdas (e.g. the ResNet option-A shortcut) are supported as long as the
    array fits VMEM."""
    out_aval = jax.eval_shape(lambd, jax.ShapeDtypeStruct(x.shape, x.dtype))
    return pl.pallas_call(
        functools.partial(_lambda_block_kernel, lambd),
        out_shape=jax.ShapeDtypeStruct(out_aval.shape, out_aval.dtype),
        compiler_params=pltpu.CompilerParams(vmem_limit_bytes=_VMEM_LIMIT),
    )(x)


class LambdaLayer:
    """Pallas-backed equivalent of the PyTorch LambdaLayer: forward(x) = lambd(x).

    elementwise=True selects the tiled lane-dense fast path (valid only for
    per-element lambdas); the default runs the lambda on a whole-array VMEM
    block, which is correct for any JAX-traceable lambda.
    """

    # TODO(synk): lambdas that are not JAX-traceable (Python side effects,
    # data-dependent Python control flow) cannot be lowered into a Pallas kernel.
    def __init__(self, lambd, elementwise=False):
        self.lambd = lambd
        self.elementwise = elementwise

    def __call__(self, x):
        if self.elementwise:
            return _apply_elementwise(self.lambd, x)
        return _apply_whole_array(self.lambd, x)

    forward = __call__


# ---------------------------------------------------------------------------
# Self-test
# ---------------------------------------------------------------------------
if __name__ == "__main__":
    key = jax.random.PRNGKey(0)
    k1, k2 = jax.random.split(key)

    # 1) Elementwise lambda on an NCHW activation (batch=2, channels=4, 16x16):
    #    tiled lane-dense fast path.
    x1 = jax.random.normal(k1, (2, 4, 16, 16), jnp.float32)
    lambd1 = lambda t: jnp.maximum(t, 0.0) + 0.5 * jnp.tanh(t)
    layer1 = LambdaLayer(lambd1, elementwise=True)
    out1 = jax.block_until_ready(jax.jit(layer1)(x1))
    ref1 = lambd1(x1)
    assert out1.shape == x1.shape
    assert jnp.allclose(out1, ref1, atol=1e-5, rtol=1e-5), "elementwise path mismatch"

    # 2) Non-elementwise lambda (row softmax): whole-array-in-VMEM general path.
    x2 = jax.random.normal(k2, (8, 256), jnp.float32)
    lambd2 = lambda t: jax.nn.softmax(t, axis=-1)
    layer2 = LambdaLayer(lambd2)  # default: always-correct path
    out2 = jax.block_until_ready(jax.jit(layer2)(x2))
    ref2 = lambd2(x2)
    assert out2.shape == x2.shape
    assert jnp.allclose(out2, ref2, atol=1e-5, rtol=1e-5), "general path mismatch"

    print("KERNEL_OK")
</pallas_src>

<mosaic_0001>
module attributes {stable_mosaic.version = 11 : i64} {
  func.func @_lambda_block_kernel(%arg0: i32, %arg1: memref<16x128xf32, #tpu.memory_space<vmem>>, %arg2: memref<16x128xf32, #tpu.memory_space<vmem>>) attributes {dimension_semantics = [#tpu.dimension_semantics<parallel>], iteration_bounds = array<i64: 1>, scalar_prefetch = 0 : i64, scratch_operands = 0 : i64, tpu.core_type = #tpu.core_type<tc>, window_params = [{transform_indices = @transform_0, window_bounds = array<i64: 16, 128>}, {transform_indices = @transform_1, window_bounds = array<i64: 16, 128>}]} {
    %c0 = arith.constant 0 : index
    %c0_0 = arith.constant 0 : index
    %0 = vector.load %arg1[%c0, %c0_0] : memref<16x128xf32, #tpu.memory_space<vmem>>, vector<16x128xf32>
    %cst = arith.constant 0.000000e+00 : f32
    %1 = vector.broadcast %cst : f32 to vector<16x128xf32>
    %2 = arith.maximumf %0, %1 : vector<16x128xf32>
    %3 = math.tanh %0 : vector<16x128xf32>
    %cst_1 = arith.constant 5.000000e-01 : f32
    %4 = vector.broadcast %cst_1 : f32 to vector<16x128xf32>
    %5 = arith.mulf %4, %3 : vector<16x128xf32>
    %6 = arith.addf %2, %5 : vector<16x128xf32>
    %c0_2 = arith.constant 0 : index
    %c0_3 = arith.constant 0 : index
    %7 = vector.load %arg2[%c0_2, %c0_3] : memref<16x128xf32, #tpu.memory_space<vmem>>, vector<16x128xf32>
    tpu.vector_store %arg2[%c0_2, %c0_3], %6 {strides = array<i32>} : memref<16x128xf32, #tpu.memory_space<vmem>>, vector<16x128xf32>,
    return
  }
  func.func @transform_0(%arg0: i32) -> (i32, i32) {
    %c0_i32 = arith.constant 0 : i32
    %c0_i32_0 = arith.constant 0 : i32
    return %arg0, %c0_i32 : i32, i32
  }
  func.func @transform_1(%arg0: i32) -> (i32, i32) {
    %c0_i32 = arith.constant 0 : i32
    %c0_i32_0 = arith.constant 0 : i32
    return %arg0, %c0_i32 : i32, i32
  }
}

</mosaic_0001>

<llo_original>
// kernel: _unnamed_function_.1
$region0: #{_unnamed_function_.1}
  #allocation0 [shape = 'u32[]', space=smem, size = 0x4, offset = 0x4, fixed_abs, tag = 'smem constant byte address 0x4 - core index']
  #allocation1 [shape = 'u32[144,128]{1,0:T(1,128)}', space=vmem, size = 0x12000, scoped, tag = 'internal scratch']
  %s0 = inlined_call_operand.vmem [shape: f32[16,128], index: 0, kind: input, shape index: {}]
  %s1 = inlined_call_operand.vmem [shape: f32[16,128], index: 1, kind: output, shape index: {}]
  %s2 = sld [smem:[#allocation0]]
  $region14: #{_unnamed_function_.1} parent=0
    _
  %s4 = ssub.s32 1, %s2
  %s5 = scalar_select 0, %s4, %s2
  // Predicated region
  $region2: #{_unnamed_function_.1} parent=0 // pred_check
    _
  $region3: #{_unnamed_function_.1} parent=0 // pred_check_branch
    %7 = sbr.rel (0) target = $region5
  $region4: #{_unnamed_function_.1} parent=0 // pred_region
    _
  $region5: #{_unnamed_function_.1} parent=0 // pred_fallthru
    _
  %v8 = vld [vmem:[%s0] sm:$0xff]
  %v9 = vld [vmem:[%s0 + $0x8] sm:$0xff]
  %v10 = vmax.f32 %v8, 0.0
  %v11 = vmax.f32 %v9, 0.0
  %v12 = vtanh.pop %v8
  %v13 = vtanh.pop %v9
  %v14 = vmul.f32 %v12, 0.5
  %v15 = vmul.f32 %v13, 0.5
  %v16 = vadd.f32 %v10, %v14
  %v17 = vadd.f32 %v11, %v15
  %18 = vst [vmem:[%s1] sm:$0xff] %v16
  %19 = vst [vmem:[%s1 + $0x8] sm:$0xff] %v17
  // Predicated region
  $region6: #{_unnamed_function_.1} parent=0 // pred_check
    _
  $region7: #{_unnamed_function_.1} parent=0 // pred_check_branch
    %21 = sbr.rel (0) target = $region9
  $region8: #{_unnamed_function_.1} parent=0 // pred_region
    _
  $region9: #{_unnamed_function_.1} parent=0 // pred_fallthru
    _
  // Predicated region
  $region10: #{_unnamed_function_.1} parent=0 // pred_check
    _
  $region11: #{_unnamed_function_.1} parent=0 // pred_check_branch
    %23 = sbr.rel (0) target = $region13
  $region12: #{_unnamed_function_.1} parent=0 // pred_region
    _
  $region13: #{_unnamed_function_.1} parent=0 // pred_fallthru
    _

</llo_original>
